<compile_context>
chip_gen: v7x
topology: tpu7x:2x2x1
jax: 0.10.0
libtpu: 0.0.40
codegen_flags: <defaults>
</compile_context>

<pallas_src>
import functools
import math

import jax
import jax.numpy as jnp
from jax.experimental import pallas as pl
from jax.experimental.pallas import tpu as pltpu


_LANE = 128      # lane (last-dim) granularity
_SUBLANE = 8     # f32/bf16-safe sublane granularity for batch tiling


def _round_up(x: int, m: int) -> int:
    return ((x + m - 1) // m) * m


def _cdiv(a: int, b: int) -> int:
    return (a + b - 1) // b


def _pad2d(a, rows, cols):
    r, c = a.shape
    if r == rows and c == cols:
        return a
    return jnp.pad(a, ((0, rows - r), (0, cols - c)))


def _pick_tile(total: int, cap: int, unit: int) -> int:
    """Largest multiple of `unit` that divides `total` and is <= cap."""
    best = unit
    t = unit
    limit = min(cap, total)
    while t <= limit:
        if total % t == 0:
            best = t
        t += unit
    return best


def _vmem_capacity_bytes() -> int:
    try:
        return int(pltpu.get_tpu_info().vmem_capacity_bytes)
    except Exception:
        return 64 * 1024 * 1024   # conservative (v7x-sized) fallback


# --------------------------------------------------------------------------
# Fused whole-network kernel (fast path).
# refs = (x_ref, w_0..w_{L-1}, b_0..b_{L-1}, o_ref); weights/biases fully
# VMEM-resident; intermediates live in vregs.
# --------------------------------------------------------------------------
def _fused_mlp_kernel(*refs, num_layers: int):
    x_ref = refs[0]
    w_refs = refs[1:1 + num_layers]
    b_refs = refs[1 + num_layers:1 + 2 * num_layers]
    o_ref = refs[1 + 2 * num_layers]

    h = x_ref[...]                                        # bf16 activations
    for i in range(num_layers):
        if i != 0:
            # cast then ReLU: identical result, bf16 VALU on v6e/v7x
            h = jnp.maximum(h.astype(jnp.bfloat16), 0.0)
        h = jnp.dot(h, w_refs[i][...],
                    preferred_element_type=jnp.float32)   # bf16 MXU, f32 acc
        h = h + b_refs[i][...]                            # (1, out) bias broadcast
    o_ref[...] = h.astype(o_ref.dtype)


# --------------------------------------------------------------------------
# Per-layer tiled linear kernel (fallback for models whose resident params
# exceed the VMEM budget). Grid (M tiles, N tiles); weight column block (K, tn)
# is re-used across batch tiles.
# --------------------------------------------------------------------------
def _linear_kernel(x_ref, w_ref, b_ref, o_ref, *, relu_input: bool):
    x = x_ref[...]
    if relu_input:
        x = jnp.maximum(x, 0.0)
    y = jnp.dot(x, w_ref[...], preferred_element_type=jnp.float32) + b_ref[...]
    o_ref[...] = y.astype(o_ref.dtype)


class FeedforwardModelPallas:
    """JAX/Pallas mirror of the PyTorch FeedforwardModel (ReLU activation)."""

    def __init__(self, n_inputs, n_outputs, layer_sizes, key):
        sizes_in = [n_inputs] + list(layer_sizes)
        sizes_out = list(layer_sizes) + [n_outputs]
        self.n_inputs = n_inputs
        self.n_outputs = n_outputs
        self.num_layers = len(sizes_in)
        self.out_pad = _round_up(n_outputs, _LANE)

        self.weights = []   # bf16, [in(_pad), out_pad]
        self.biases = []    # f32,  [1, out_pad]
        last_layer = self.num_layers - 1
        for i, (in_s, out_s) in enumerate(zip(sizes_in, sizes_out)):
            key, wk = jax.random.split(key)
            # xavier_normal_ with relu gain for hidden layers, 1.0 for the last
            # (matches reset_parameters); biases zeroed as in reset_parameters.
            gain = 1.0 if i == last_layer else math.sqrt(2.0)
            std = gain * math.sqrt(2.0 / (in_s + out_s))
            w = jax.random.normal(wk, (in_s, out_s), dtype=jnp.float32) * std
            # Layer 0 keeps its natural K (input feature dim); hidden K's are
            # already 128-padded because they equal the previous layer's out_pad.
            in_p = in_s if i == 0 else _round_up(in_s, _LANE)
            out_p = _round_up(out_s, _LANE)
            self.weights.append(_pad2d(w, in_p, out_p).astype(jnp.bfloat16))
            self.biases.append(jnp.zeros((1, out_p), dtype=jnp.float32))

        self._weights_single_buffer = None   # resolved on first call

    # -- optional path to load real (e.g. trained PyTorch) parameters ---------
    def load_params(self, torch_weights, torch_biases):
        """torch_weights[i]: [out, in]; torch_biases[i]: [out] (PyTorch layout)."""
        new_w, new_b = [], []
        for i, (w, b) in enumerate(zip(torch_weights, torch_biases)):
            w = jnp.asarray(w, jnp.float32).T               # -> [in, out]
            b = jnp.asarray(b, jnp.float32).reshape(1, -1)
            in_p, out_p = self.weights[i].shape
            new_w.append(_pad2d(w, in_p, out_p).astype(jnp.bfloat16))
            new_b.append(_pad2d(b, 1, out_p))
        self.weights, self.biases = new_w, new_b

    # -------------------------------------------------------------------------
    def __call__(self, x):
        batch = x.shape[0]
        x = x.astype(jnp.bfloat16)                          # stream activations in bf16

        vmem_cap = int(0.85 * _vmem_capacity_bytes())       # generation-aware cap
        param_bytes = (sum(int(w.size) * 2 for w in self.weights)
                       + sum(int(b.size) * 4 for b in self.biases))
        in_dim = self.weights[0].shape[0]
        max_hidden = max(w.shape[1] for w in self.weights)
        scratch = 2 << 20

        # Per-row activation VMEM: double-buffered bf16 input + f32 output tile,
        # plus the widest f32 intermediate and its bf16 copy.
        row_bytes = 2 * (2 * in_dim + 4 * self.out_pad) + 6 * max_hidden

        if param_bytes + scratch + _SUBLANE * row_bytes > vmem_cap:
            # Resident params don't fit -> per-layer feature-tiled fallback.
            return self._forward_layerwise(x, batch, vmem_cap)

        budget = vmem_cap - param_bytes - scratch
        max_tile = max(_SUBLANE,
                       min(1024, (budget // row_bytes) // _SUBLANE * _SUBLANE))

        batch_p = _round_up(batch, _SUBLANE)
        # >=2 grid steps when possible so both v7x TensorCores get work
        # (a second ~0.35us grid step is free on single-TC v5e/v6e).
        min_tiles = 2 if batch_p >= 2 * _SUBLANE else 1
        base_tiles = max(min_tiles, _cdiv(batch_p, max_tile))
        best = None
        for nt in range(base_tiles, min(base_tiles + 8, batch_p // _SUBLANE) + 1):
            tm = _round_up(_cdiv(batch_p, nt), _SUBLANE)
            cand = (nt * tm - batch_p, nt, tm)              # (padding waste, tiles, tile)
            if best is None or cand < best:
                best = cand
        _, num_tiles, tile_m = best
        padded_batch = num_tiles * tile_m

        x_p = _pad2d(x, padded_batch, in_dim)               # no feature-dim padding

        vmem_limit = max(4 << 20,
                         min(vmem_cap, param_bytes + scratch + tile_m * row_bytes))

        def _build(single_buffer_weights, limit):
            pkw = ({"pipeline_mode": pl.Buffered(1)}        # constant blocks: 1 buffer
                   if single_buffer_weights else {})
            in_specs = [pl.BlockSpec((tile_m, in_dim), lambda i: (i, 0))]
            for w in self.weights:
                in_specs.append(pl.BlockSpec(w.shape, lambda i: (0, 0), **pkw))
            for b in self.biases:
                in_specs.append(pl.BlockSpec(b.shape, lambda i: (0, 0), **pkw))
            out_specs = pl.BlockSpec((tile_m, self.out_pad), lambda i: (i, 0))
            kernel = functools.partial(_fused_mlp_kernel, num_layers=self.num_layers)
            return pl.pallas_call(
                kernel,
                out_shape=jax.ShapeDtypeStruct((padded_batch, self.out_pad),
                                               jnp.float32),
                grid=(num_tiles,),
                in_specs=in_specs,
                out_specs=out_specs,
                compiler_params=pltpu.CompilerParams(
                    dimension_semantics=("parallel",),      # batch tiles shard across TCs
                    vmem_limit_bytes=int(limit)),
            )

        args = (x_p, *self.weights, *self.biases)
        limit_db = min(vmem_cap, vmem_limit + param_bytes)  # if weights end up 2x-buffered
        if self._weights_single_buffer is None:
            try:
                out_p = _build(True, vmem_limit)(*args)
                jax.block_until_ready(out_p)
                self._weights_single_buffer = True
            except Exception:
                self._weights_single_buffer = False
                out_p = _build(False, limit_db)(*args)
        elif self._weights_single_buffer:
            out_p = _build(True, vmem_limit)(*args)
        else:
            out_p = _build(False, limit_db)(*args)

        return out_p[:batch, :self.n_outputs]

    # -- fallback: per-layer (M, N)-tiled linear kernels ----------------------
    def _forward_layerwise(self, x, batch, vmem_cap):
        # TODO(synk): a K-tiled accumulator variant would be needed for layers
        # whose single (K, tn) weight column block itself exceeds VMEM.
        batch_p = _round_up(batch, _SUBLANE)
        tm = _pick_tile(batch_p, 256, _SUBLANE)
        num_m = batch_p // tm
        h = _pad2d(x, batch_p, x.shape[1])
        for i, (w, b) in enumerate(zip(self.weights, self.biases)):
            K, N = w.shape
            tn = _pick_tile(N, 512, _LANE)
            last = (i == self.num_layers - 1)
            out_dtype = jnp.float32 if last else jnp.bfloat16   # bf16 intermediates
            h = pl.pallas_call(
                functools.partial(_linear_kernel, relu_input=(i != 0)),
                out_shape=jax.ShapeDtypeStruct((batch_p, N), out_dtype),
                grid=(num_m, N // tn),
                in_specs=[pl.BlockSpec((tm, K), lambda m, n: (m, 0)),
                          pl.BlockSpec((K, tn), lambda m, n: (0, n)),
                          pl.BlockSpec((1, tn), lambda m, n: (0, n))],
                out_specs=pl.BlockSpec((tm, tn), lambda m, n: (m, n)),
                compiler_params=pltpu.CompilerParams(
                    dimension_semantics=("parallel", "parallel"),
                    vmem_limit_bytes=int(vmem_cap)),
            )(h, w, b)
        return h[:batch, :self.n_outputs]


def _reference_forward(model, x):
    # Pure-JAX reference doing the identical (bf16-activation, bf16-weight,
    # f32-accumulate) math on the padded parameters.
    h = x.astype(jnp.bfloat16)
    for i, (w, b) in enumerate(zip(model.weights, model.biases)):
        if i != 0:
            h = jnp.maximum(h.astype(jnp.bfloat16), 0.0)
        h = jnp.dot(h, w, preferred_element_type=jnp.float32) + b
    return h[:, :model.n_outputs]


if __name__ == "__main__":
    key = jax.random.PRNGKey(0)
    n_inputs, n_outputs = 16, 8
    layer_sizes = [32, 32]
    batch = 4

    model = FeedforwardModelPallas(n_inputs, n_outputs, layer_sizes, key)
    x = jax.random.normal(jax.random.PRNGKey(1), (batch, n_inputs), dtype=jnp.float32)

    # 1) reset_parameters-style init (zero biases), fused path.
    out = jax.block_until_ready(model(x))
    ref = _reference_forward(model, x)
    assert out.shape == (batch, n_outputs)
    assert jnp.allclose(out, ref, atol=2e-2, rtol=2e-2), (
        f"max abs diff = {jnp.max(jnp.abs(out - ref))}")

    # 2) nonzero PyTorch-layout weights AND biases through load_params.
    k2 = jax.random.PRNGKey(2)
    tws, tbs = [], []
    for in_s, out_s in zip([n_inputs] + layer_sizes, layer_sizes + [n_outputs]):
        k2, kw, kb = jax.random.split(k2, 3)
        tws.append(jax.random.normal(kw, (out_s, in_s), dtype=jnp.float32) * 0.3)
        tbs.append(jax.random.normal(kb, (out_s,), dtype=jnp.float32) * 0.1)
    model.load_params(tws, tbs)
    out2 = jax.block_until_ready(model(x))
    ref2 = _reference_forward(model, x)
    assert jnp.allclose(out2, ref2, atol=2e-2, rtol=2e-2), (
        f"max abs diff = {jnp.max(jnp.abs(out2 - ref2))}")

    # 3) exercise the layer-tiled fallback path (same math, per-layer kernels).
    out3 = jax.block_until_ready(
        model._forward_layerwise(x.astype(jnp.bfloat16), batch,
                                 int(0.85 * _vmem_capacity_bytes())))
    assert jnp.allclose(out3, ref2, atol=2e-2, rtol=2e-2), (
        f"max abs diff = {jnp.max(jnp.abs(out3 - ref2))}")

    # 4) ragged batch (not a power-of-two tile) through the fused path.
    xb = jax.random.normal(jax.random.PRNGKey(3), (20, n_inputs), dtype=jnp.float32)
    outb = jax.block_until_ready(model(xb))
    refb = _reference_forward(model, xb)
    assert outb.shape == (20, n_outputs)
    assert jnp.allclose(outb, refb, atol=2e-2, rtol=2e-2), (
        f"max abs diff = {jnp.max(jnp.abs(outb - refb))}")

    print("KERNEL_OK")
</pallas_src>

<mosaic_0001>
module attributes {stable_mosaic.version = 11 : i64} {
  func.func @_fused_mlp_kernel(%arg0: i32, %arg1: memref<8x16xbf16, #tpu.memory_space<vmem>>, %arg2: memref<16x128xbf16, #tpu.memory_space<vmem>>, %arg3: memref<128x128xbf16, #tpu.memory_space<vmem>>, %arg4: memref<128x128xbf16, #tpu.memory_space<vmem>>, %arg5: memref<1x128xf32, #tpu.memory_space<vmem>>, %arg6: memref<1x128xf32, #tpu.memory_space<vmem>>, %arg7: memref<1x128xf32, #tpu.memory_space<vmem>>, %arg8: memref<8x128xf32, #tpu.memory_space<vmem>>) attributes {dimension_semantics = [#tpu.dimension_semantics<parallel>], iteration_bounds = array<i64: 1>, scalar_prefetch = 0 : i64, scratch_operands = 0 : i64, tpu.core_type = #tpu.core_type<tc>, window_params = [{transform_indices = @transform_0, window_bounds = array<i64: 8, 16>}, {pipeline_mode = #tpu.pipeline_mode<synchronous>, transform_indices = @transform_1, window_bounds = array<i64: 16, 128>}, {pipeline_mode = #tpu.pipeline_mode<synchronous>, transform_indices = @transform_2, window_bounds = array<i64: 128, 128>}, {pipeline_mode = #tpu.pipeline_mode<synchronous>, transform_indices = @transform_3, window_bounds = array<i64: 128, 128>}, {pipeline_mode = #tpu.pipeline_mode<synchronous>, transform_indices = @transform_4, window_bounds = array<i64: 1, 128>}, {pipeline_mode = #tpu.pipeline_mode<synchronous>, transform_indices = @transform_5, window_bounds = array<i64: 1, 128>}, {pipeline_mode = #tpu.pipeline_mode<synchronous>, transform_indices = @transform_6, window_bounds = array<i64: 1, 128>}, {transform_indices = @transform_7, window_bounds = array<i64: 8, 128>}]} {
    %c0 = arith.constant 0 : index
    %c0_0 = arith.constant 0 : index
    %0 = vector.load %arg1[%c0, %c0_0] : memref<8x16xbf16, #tpu.memory_space<vmem>>, vector<8x16xbf16>
    %c0_1 = arith.constant 0 : index
    %c0_2 = arith.constant 0 : index
    %1 = vector.load %arg2[%c0_1, %c0_2] : memref<16x128xbf16, #tpu.memory_space<vmem>>, vector<16x128xbf16>
    %cst = arith.constant dense<0.000000e+00> : vector<8x128xf32>
    %2 = tpu.matmul %0, %1, %cst {dimension_numbers = #tpu.dot_dimension_numbers<[1], [0], [0], [1], [0, 0, 1, 1], [], []>} : vector<8x16xbf16>, vector<16x128xbf16>, vector<8x128xf32> -> vector<8x128xf32>
    %c0_3 = arith.constant 0 : index
    %c0_4 = arith.constant 0 : index
    %3 = vector.load %arg5[%c0_3, %c0_4] : memref<1x128xf32, #tpu.memory_space<vmem>>, vector<1x128xf32>
    %4 = vector.broadcast %3 : vector<1x128xf32> to vector<8x128xf32>
    %5 = arith.addf %2, %4 : vector<8x128xf32>
    %6 = arith.truncf %5 : vector<8x128xf32> to vector<8x128xbf16>
    %cst_5 = arith.constant 0.000000e+00 : bf16
    %7 = vector.broadcast %cst_5 : bf16 to vector<8x128xbf16>
    %8 = arith.maximumf %6, %7 : vector<8x128xbf16>
    %c0_6 = arith.constant 0 : index
    %c0_7 = arith.constant 0 : index
    %9 = vector.load %arg3[%c0_6, %c0_7] : memref<128x128xbf16, #tpu.memory_space<vmem>>, vector<128x128xbf16>
    %cst_8 = arith.constant dense<0.000000e+00> : vector<8x128xf32>
    %10 = tpu.matmul %8, %9, %cst_8 {dimension_numbers = #tpu.dot_dimension_numbers<[1], [0], [0], [1], [0, 0, 1, 1], [], []>} : vector<8x128xbf16>, vector<128x128xbf16>, vector<8x128xf32> -> vector<8x128xf32>
    %c0_9 = arith.constant 0 : index
    %c0_10 = arith.constant 0 : index
    %11 = vector.load %arg6[%c0_9, %c0_10] : memref<1x128xf32, #tpu.memory_space<vmem>>, vector<1x128xf32>
    %12 = vector.broadcast %11 : vector<1x128xf32> to vector<8x128xf32>
    %13 = arith.addf %10, %12 : vector<8x128xf32>
    %14 = arith.truncf %13 : vector<8x128xf32> to vector<8x128xbf16>
    %cst_11 = arith.constant 0.000000e+00 : bf16
    %15 = vector.broadcast %cst_11 : bf16 to vector<8x128xbf16>
    %16 = arith.maximumf %14, %15 : vector<8x128xbf16>
    %c0_12 = arith.constant 0 : index
    %c0_13 = arith.constant 0 : index
    %17 = vector.load %arg4[%c0_12, %c0_13] : memref<128x128xbf16, #tpu.memory_space<vmem>>, vector<128x128xbf16>
    %cst_14 = arith.constant dense<0.000000e+00> : vector<8x128xf32>
    %18 = tpu.matmul %16, %17, %cst_14 {dimension_numbers = #tpu.dot_dimension_numbers<[1], [0], [0], [1], [0, 0, 1, 1], [], []>} : vector<8x128xbf16>, vector<128x128xbf16>, vector<8x128xf32> -> vector<8x128xf32>
    %c0_15 = arith.constant 0 : index
    %c0_16 = arith.constant 0 : index
    %19 = vector.load %arg7[%c0_15, %c0_16] : memref<1x128xf32, #tpu.memory_space<vmem>>, vector<1x128xf32>
    %20 = vector.broadcast %19 : vector<1x128xf32> to vector<8x128xf32>
    %21 = arith.addf %18, %20 : vector<8x128xf32>
    %c0_17 = arith.constant 0 : index
    %c0_18 = arith.constant 0 : index
    %22 = vector.load %arg8[%c0_17, %c0_18] : memref<8x128xf32, #tpu.memory_space<vmem>>, vector<8x128xf32>
    tpu.vector_store %arg8[%c0_17, %c0_18], %21 {strides = array<i32>} : memref<8x128xf32, #tpu.memory_space<vmem>>, vector<8x128xf32>,
    return
  }
  func.func @transform_0(%arg0: i32) -> (i32, i32) {
    %c0_i32 = arith.constant 0 : i32
    %c0_i32_0 = arith.constant 0 : i32
    return %arg0, %c0_i32 : i32, i32
  }
  func.func @transform_1(%arg0: i32) -> (i32, i32) {
    %c0_i32 = arith.constant 0 : i32
    %c0_i32_0 = arith.constant 0 : i32
    %c0_i32_1 = arith.constant 0 : i32
    return %c0_i32, %c0_i32_0 : i32, i32
  }
  func.func @transform_2(%arg0: i32) -> (i32, i32) {
    %c0_i32 = arith.constant 0 : i32
    %c0_i32_0 = arith.constant 0 : i32
    %c0_i32_1 = arith.constant 0 : i32
    return %c0_i32, %c0_i32_0 : i32, i32
  }
  func.func @transform_3(%arg0: i32) -> (i32, i32) {
    %c0_i32 = arith.constant 0 : i32
    %c0_i32_0 = arith.constant 0 : i32
    %c0_i32_1 = arith.constant 0 : i32
    return %c0_i32, %c0_i32_0 : i32, i32
  }
  func.func @transform_4(%arg0: i32) -> (i32, i32) {
    %c0_i32 = arith.constant 0 : i32
    %c0_i32_0 = arith.constant 0 : i32
    %c0_i32_1 = arith.constant 0 : i32
    return %c0_i32, %c0_i32_0 : i32, i32
  }
  func.func @transform_5(%arg0: i32) -> (i32, i32) {
    %c0_i32 = arith.constant 0 : i32
    %c0_i32_0 = arith.constant 0 : i32
    %c0_i32_1 = arith.constant 0 : i32
    return %c0_i32, %c0_i32_0 : i32, i32
  }
  func.func @transform_6(%arg0: i32) -> (i32, i32) {
    %c0_i32 = arith.constant 0 : i32
    %c0_i32_0 = arith.constant 0 : i32
    %c0_i32_1 = arith.constant 0 : i32
    return %c0_i32, %c0_i32_0 : i32, i32
  }
  func.func @transform_7(%arg0: i32) -> (i32, i32) {
    %c0_i32 = arith.constant 0 : i32
    %c0_i32_0 = arith.constant 0 : i32
    return %arg0, %c0_i32 : i32, i32
  }
}

module attributes {stable_mosaic.version = 11 : i64} {
  func.func @_fused_mlp_kernel(%arg0: i32, %arg1: memref<8x16xbf16, #tpu.memory_space<vmem>>, %arg2: memref<16x128xbf16, #tpu.memory_space<vmem>>, %arg3: memref<128x128xbf16, #tpu.memory_space<vmem>>, %arg4: memref<128x128xbf16, #tpu.memory_space<vmem>>, %arg5: memref<1x128xf32, #tpu.memory_space<vmem>>, %arg6: memref<1x128xf32, #tpu.memory_space<vmem>>, %arg7: memref<1x128xf32, #tpu.memory_space<vmem>>, %arg8: memref<8x128xf32, #tpu.memory_space<vmem>>) attributes {dimension_semantics = [#tpu.dimension_semantics<parallel>], iteration_bounds = array<i64: 1>, scalar_prefetch = 0 : i64, scratch_operands = 0 : i64, tpu.core_type = #tpu.core_type<tc>, window_params = [{transform_indices = @transform_0, window_bounds = array<i64: 8, 16>}, {pipeline_mode = #tpu.pipeline_mode<synchronous>, transform_indices = @transform_1, window_bounds = array<i64: 16, 128>}, {pipeline_mode = #tpu.pipeline_mode<synchronous>, transform_indices = @transform_2, window_bounds = array<i64: 128, 128>}, {pipeline_mode = #tpu.pipeline_mode<synchronous>, transform_indices = @transform_3, window_bounds = array<i64: 128, 128>}, {pipeline_mode = #tpu.pipeline_mode<synchronous>, transform_indices = @transform_4, window_bounds = array<i64: 1, 128>}, {pipeline_mode = #tpu.pipeline_mode<synchronous>, transform_indices = @transform_5, window_bounds = array<i64: 1, 128>}, {pipeline_mode = #tpu.pipeline_mode<synchronous>, transform_indices = @transform_6, window_bounds = array<i64: 1, 128>}, {transform_indices = @transform_7, window_bounds = array<i64: 8, 128>}]} {
    %c0 = arith.constant 0 : index
    %c0_0 = arith.constant 0 : index
    %0 = vector.load %arg1[%c0, %c0_0] : memref<8x16xbf16, #tpu.memory_space<vmem>>, vector<8x16xbf16>
    %c0_1 = arith.constant 0 : index
    %c0_2 = arith.constant 0 : index
    %1 = vector.load %arg2[%c0_1, %c0_2] : memref<16x128xbf16, #tpu.memory_space<vmem>>, vector<16x128xbf16>
    %cst = arith.constant dense<0.000000e+00> : vector<8x128xf32>
    %2 = tpu.matmul %0, %1, %cst {dimension_numbers = #tpu.dot_dimension_numbers<[1], [0], [0], [1], [0, 0, 1, 1], [], []>} : vector<8x16xbf16>, vector<16x128xbf16>, vector<8x128xf32> -> vector<8x128xf32>
    %c0_3 = arith.constant 0 : index
    %c0_4 = arith.constant 0 : index
    %3 = vector.load %arg5[%c0_3, %c0_4] : memref<1x128xf32, #tpu.memory_space<vmem>>, vector<1x128xf32>
    %4 = vector.broadcast %3 : vector<1x128xf32> to vector<8x128xf32>
    %5 = arith.addf %2, %4 : vector<8x128xf32>
    %6 = arith.truncf %5 : vector<8x128xf32> to vector<8x128xbf16>
    %cst_5 = arith.constant 0.000000e+00 : bf16
    %7 = vector.broadcast %cst_5 : bf16 to vector<8x128xbf16>
    %8 = arith.maximumf %6, %7 : vector<8x128xbf16>
    %c0_6 = arith.constant 0 : index
    %c0_7 = arith.constant 0 : index
    %9 = vector.load %arg3[%c0_6, %c0_7] : memref<128x128xbf16, #tpu.memory_space<vmem>>, vector<128x128xbf16>
    %cst_8 = arith.constant dense<0.000000e+00> : vector<8x128xf32>
    %10 = tpu.matmul %8, %9, %cst_8 {dimension_numbers = #tpu.dot_dimension_numbers<[1], [0], [0], [1], [0, 0, 1, 1], [], []>} : vector<8x128xbf16>, vector<128x128xbf16>, vector<8x128xf32> -> vector<8x128xf32>
    %c0_9 = arith.constant 0 : index
    %c0_10 = arith.constant 0 : index
    %11 = vector.load %arg6[%c0_9, %c0_10] : memref<1x128xf32, #tpu.memory_space<vmem>>, vector<1x128xf32>
    %12 = vector.broadcast %11 : vector<1x128xf32> to vector<8x128xf32>
    %13 = arith.addf %10, %12 : vector<8x128xf32>
    %14 = arith.truncf %13 : vector<8x128xf32> to vector<8x128xbf16>
    %cst_11 = arith.constant 0.000000e+00 : bf16
    %15 = vector.broadcast %cst_11 : bf16 to vector<8x128xbf16>
    %16 = arith.maximumf %14, %15 : vector<8x128xbf16>
    %c0_12 = arith.constant 0 : index
    %c0_13 = arith.constant 0 : index
    %17 = vector.load %arg4[%c0_12, %c0_13] : memref<128x128xbf16, #tpu.memory_space<vmem>>, vector<128x128xbf16>
    %cst_14 = arith.constant dense<0.000000e+00> : vector<8x128xf32>
    %18 = tpu.matmul %16, %17, %cst_14 {dimension_numbers = #tpu.dot_dimension_numbers<[1], [0], [0], [1], [0, 0, 1, 1], [], []>} : vector<8x128xbf16>, vector<128x128xbf16>, vector<8x128xf32> -> vector<8x128xf32>
    %c0_15 = arith.constant 0 : index
    %c0_16 = arith.constant 0 : index
    %19 = vector.load %arg7[%c0_15, %c0_16] : memref<1x128xf32, #tpu.memory_space<vmem>>, vector<1x128xf32>
    %20 = vector.broadcast %19 : vector<1x128xf32> to vector<8x128xf32>
    %21 = arith.addf %18, %20 : vector<8x128xf32>
    %c0_17 = arith.constant 0 : index
    %c0_18 = arith.constant 0 : index
    %22 = vector.load %arg8[%c0_17, %c0_18] : memref<8x128xf32, #tpu.memory_space<vmem>>, vector<8x128xf32>
    tpu.vector_store %arg8[%c0_17, %c0_18], %21 {strides = array<i32>} : memref<8x128xf32, #tpu.memory_space<vmem>>, vector<8x128xf32>,
    return
  }
  func.func @transform_0(%arg0: i32) -> (i32, i32) {
    %c0_i32 = arith.constant 0 : i32
    %c0_i32_0 = arith.constant 0 : i32
    return %arg0, %c0_i32 : i32, i32
  }
  func.func @transform_1(%arg0: i32) -> (i32, i32) {
    %c0_i32 = arith.constant 0 : i32
    %c0_i32_0 = arith.constant 0 : i32
    %c0_i32_1 = arith.constant 0 : i32
    return %c0_i32, %c0_i32_0 : i32, i32
  }
  func.func @transform_2(%arg0: i32) -> (i32, i32) {
    %c0_i32 = arith.constant 0 : i32
    %c0_i32_0 = arith.constant 0 : i32
    %c0_i32_1 = arith.constant 0 : i32
    return %c0_i32, %c0_i32_0 : i32, i32
  }
  func.func @transform_3(%arg0: i32) -> (i32, i32) {
    %c0_i32 = arith.constant 0 : i32
    %c0_i32_0 = arith.constant 0 : i32
    %c0_i32_1 = arith.constant 0 : i32
    return %c0_i32, %c0_i32_0 : i32, i32
  }
  func.func @transform_4(%arg0: i32) -> (i32, i32) {
    %c0_i32 = arith.constant 0 : i32
    %c0_i32_0 = arith.constant 0 : i32
    %c0_i32_1 = arith.constant 0 : i32
    return %c0_i32, %c0_i32_0 : i32, i32
  }
  func.func @transform_5(%arg0: i32) -> (i32, i32) {
    %c0_i32 = arith.constant 0 : i32
    %c0_i32_0 = arith.constant 0 : i32
    %c0_i32_1 = arith.constant 0 : i32
    return %c0_i32, %c0_i32_0 : i32, i32
  }
  func.func @transform_6(%arg0: i32) -> (i32, i32) {
    %c0_i32 = arith.constant 0 : i32
    %c0_i32_0 = arith.constant 0 : i32
    %c0_i32_1 = arith.constant 0 : i32
    return %c0_i32, %c0_i32_0 : i32, i32
  }
  func.func @transform_7(%arg0: i32) -> (i32, i32) {
    %c0_i32 = arith.constant 0 : i32
    %c0_i32_0 = arith.constant 0 : i32
    return %arg0, %c0_i32 : i32, i32
  }
}

</mosaic_0001>

<llo_original>
// kernel: tpu_custom_call.1
$region0: #{tpu_custom_call.1}
  #allocation0 [shape = 'u32[]', space=smem, size = 0x4, offset = 0x4, fixed_abs, tag = 'smem constant byte address 0x4 - core index']
  #allocation1 [shape = 'u32[144,128]{1,0:T(1,128)}', space=vmem, size = 0x12000, scoped, tag = 'internal scratch']
  %s0 = inlined_call_operand.hbm [shape: bf16[8,16], index: 0, kind: input, shape index: {}]
  %s1 = inlined_call_operand.hbm [shape: bf16[16,128], index: 1, kind: input, shape index: {}]
  %s2 = inlined_call_operand.hbm [shape: bf16[128,128], index: 2, kind: input, shape index: {}]
  %s3 = inlined_call_operand.hbm [shape: bf16[128,128], index: 3, kind: input, shape index: {}]
  %s4 = inlined_call_operand.vmem [shape: f32[1,128], index: 4, kind: input, shape index: {}]
  %s5 = inlined_call_operand.vmem [shape: f32[1,128], index: 5, kind: input, shape index: {}]
  %s6 = inlined_call_operand.vmem [shape: f32[1,128], index: 6, kind: input, shape index: {}]
  %s7 = inlined_call_operand.hbm [shape: f32[8,128], index: 7, kind: output, shape index: {}]
  %s8 = sld [smem:[#allocation0]]
  $region54: #{tpu_custom_call.1} parent=0
    _
  %s10 = ssub.s32 1, %s8
  %s11 = scalar_select 0, %s10, %s8
  $region1: #{tpu_custom_call.1} parent=0
    #allocation2 [shape = 'u8[2048]{0}', space=vmem, size = 0x800, scoped, tag = 'input window, operand 0, single buffered']
    #allocation3 [shape = 's32[1]{0}', space=sflag, size = 0x4, scoped, tag = 'scoped memory for tpu_custom_call.1']
    #allocation4 [shape = 's32[1]{0}', space=sflag, size = 0x4, scoped, tag = 'scoped memory for tpu_custom_call.1']
    #allocation5 [shape = 'u8[4096]{0}', space=vmem, size = 0x1000, scoped, tag = 'input window, operand 1, single buffered']
    #allocation6 [shape = 's32[1]{0}', space=sflag, size = 0x4, scoped, tag = 'scoped memory for tpu_custom_call.1']
    #allocation7 [shape = 'u8[32768]{0}', space=vmem, size = 0x8000, scoped, tag = 'input window, operand 2, single buffered']
    #allocation8 [shape = 'u8[32768]{0}', space=vmem, size = 0x8000, scoped, tag = 'input window, operand 3, single buffered']
    #allocation9 [shape = 's32[1]{0}', space=sflag, size = 0x4, scoped, tag = 'scoped memory for tpu_custom_call.1']
    #allocation10 [shape = 'u8[4096]{0}', space=vmem, size = 0x1000, scoped, tag = 'output window, operand 0, single buffered']
    %12 = vsyncpa [#allocation3], 0
    %13 = vsyncpa [#allocation6], 0
    %14 = vsyncpa [#allocation9], 0
    %15 = vsyncpa [#allocation4], 0
    // Predicated region
    $region2: #{tpu_custom_call.1} parent=1 // pred_check
      _
    $region3: #{tpu_custom_call.1} parent=1 // pred_check_branch
      %17 = sbr.rel (0) target = $region5
    $region4: #{tpu_custom_call.1} parent=1 // pred_region
      %s19 = ssub.s32 64, 64
      %20 = vsyncadd [#allocation3], %s19
      %s22 = sshll.u32 [#allocation2], 4
      %s23 = int_to_ptr.vmem [resolvable:$true] %s22
      %25 = dma.hbm_to_vmem [thread:$0]  %s0, 64, %s23, [#allocation3]
    $region5: #{tpu_custom_call.1} parent=1 // pred_fallthru
      _
    // Predicated region
    $region6: #{tpu_custom_call.1} parent=1 // pred_check
      _
    $region7: #{tpu_custom_call.1} parent=1 // pred_check_branch
      %27 = sbr.rel (0) target = $region9
    $region8: #{tpu_custom_call.1} parent=1 // pred_region
      %s29 = ssub.s32 128, 128
      %30 = vsyncadd [#allocation6], %s29
      %s31 = sshll.u32 [#allocation5], 4
      %s32 = int_to_ptr.vmem [resolvable:$true] %s31
      %37 = dma.hbm_to_vmem [thread:$0]  %s1, 128, %s32, [#allocation6], 64, 64, 4
    $region9: #{tpu_custom_call.1} parent=1 // pred_fallthru
      _
    // Predicated region
    $region10: #{tpu_custom_call.1} parent=1 // pred_check
      _
    $region11: #{tpu_custom_call.1} parent=1 // pred_check_branch
      %39 = sbr.rel (0) target = $region13
    $region12: #{tpu_custom_call.1} parent=1 // pred_region
      %s41 = ssub.s32 1024, 1024
      %42 = vsyncadd [#allocation6], %s41
      %s43 = sshll.u32 [#allocation7], 4
      %s44 = int_to_ptr.vmem [resolvable:$true] %s43
      %49 = dma.hbm_to_vmem [thread:$0]  %s2, 1024, %s44, [#allocation6], 64, 64, 4
    $region13: #{tpu_custom_call.1} parent=1 // pred_fallthru
      _
    // Predicated region
    $region14: #{tpu_custom_call.1} parent=1 // pred_check
      _
    $region15: #{tpu_custom_call.1} parent=1 // pred_check_branch
      %51 = sbr.rel (0) target = $region17
    $region16: #{tpu_custom_call.1} parent=1 // pred_region
      %s53 = ssub.s32 1024, 1024
      %54 = vsyncadd [#allocation9], %s53
      %s55 = sshll.u32 [#allocation8], 4
      %s56 = int_to_ptr.vmem [resolvable:$true] %s55
      %61 = dma.hbm_to_vmem [thread:$0]  %s3, 1024, %s56, [#allocation9], 64, 64, 4
    $region17: #{tpu_custom_call.1} parent=1 // pred_fallthru
      _
    // Predicated region
    $region18: #{tpu_custom_call.1} parent=1 // pred_check
      _
    $region19: #{tpu_custom_call.1} parent=1 // pred_check_branch
      %63 = sbr.rel (0) target = $region21
    $region20: #{tpu_custom_call.1} parent=1 // pred_region
      _
    $region21: #{tpu_custom_call.1} parent=1 // pred_fallthru
      _
    // Predicated region
    $region22: #{tpu_custom_call.1} parent=1 // pred_check
      _
    $region23: #{tpu_custom_call.1} parent=1 // pred_check_branch
      %65 = sbr.rel (0) target = $region25
    $region24: #{tpu_custom_call.1} parent=1 // pred_region
      _
    $region25: #{tpu_custom_call.1} parent=1 // pred_fallthru
      _
    // Predicated region
    $region26: #{tpu_custom_call.1} parent=1 // pred_check
      _
    $region27: #{tpu_custom_call.1} parent=1 // pred_check_branch
      %67 = sbr.rel (0) target = $region29
    $region28: #{tpu_custom_call.1} parent=1 // pred_region
      _
    $region29: #{tpu_custom_call.1} parent=1 // pred_fallthru
      _
    // Predicated region
    $region30: #{tpu_custom_call.1} parent=1 // pred_check
      _
    $region31: #{tpu_custom_call.1} parent=1 // pred_check_branch
      %69 = sbr.rel (0) target = $region33
    $region32: #{tpu_custom_call.1} parent=1 // pred_region
      %70 = dma.done [#allocation3], 64
    $region33: #{tpu_custom_call.1} parent=1 // pred_fallthru
      _
    // Predicated region
    $region34: #{tpu_custom_call.1} parent=1 // pred_check
      _
    $region35: #{tpu_custom_call.1} parent=1 // pred_check_branch
      %72 = sbr.rel (0) target = $region37
    $region36: #{tpu_custom_call.1} parent=1 // pred_region
      %73 = dma.done [#allocation6], 128
    $region37: #{tpu_custom_call.1} parent=1 // pred_fallthru
      _
    // Predicated region
    $region38: #{tpu_custom_call.1} parent=1 // pred_check
      _
    $region39: #{tpu_custom_call.1} parent=1 // pred_check_branch
      %75 = sbr.rel (0) target = $region41
    $region40: #{tpu_custom_call.1} parent=1 // pred_region
      %76 = dma.done [#allocation6], 1024
    $region41: #{tpu_custom_call.1} parent=1 // pred_fallthru
      _
    // Predicated region
    $region42: #{tpu_custom_call.1} parent=1 // pred_check
      _
    $region43: #{tpu_custom_call.1} parent=1 // pred_check_branch
      %78 = sbr.rel (0) target = $region45
    $region44: #{tpu_custom_call.1} parent=1 // pred_region
      %79 = dma.done [#allocation9], 1024
    $region45: #{tpu_custom_call.1} parent=1 // pred_fallthru
      _
    %v81 = vld [vmem:[#allocation2] sm:$0xf]
    %v82 = vld [vmem:[#allocation5] sm:$0xf]
    %v83 = vld [vmem:[#allocation5 + $0x4] sm:$0xf]
    %v84 = vld [vmem:[%s4] sm:$0x1]
    %v86 = vlaneseq
    %v87 = vshrl.u32 %v86, 7
    %v88 = vsub.s32 0, %v87
    %v89 = vrot.slane %v84, %v88
    %v93 = vunpack.c.l.b16 %v82
    %v94 = vunpack.c.l.b16 %v83
    %v95 = vpack.c.b16 %v94, %v93
    %vm97 = vcmask 130048
    %v99 = vsel %vm97, %v81, 0
    %101 = vmatprep.subr.bf16.mxu0 0
    %102 = vmatpush1.bf16.msra.mxu0 %v95
    %103 = vmatprep.subr.bf16.mxu0 0
    %104 = vmatpush1.bf16.msra.mxu0 0
    %105 = vmatprep.subr.bf16.mxu0 0
    %106 = vmatpush1.bf16.msra.mxu0 0
    %107 = vmatprep.subr.bf16.mxu0 0
    %108 = vmatpush1.bf16.msra.mxu0 0
    %109 = vmatprep.subr.bf16.mxu0 0
    %110 = vmatpush1.bf16.msra.mxu0 0
    %111 = vmatprep.subr.bf16.mxu0 0
    %112 = vmatpush1.bf16.msra.mxu0 0
    %113 = vmatprep.subr.bf16.mxu0 0
    %114 = vmatpush1.bf16.msra.mxu0 0
    %115 = vmatprep.subr.bf16.mxu0 0
    %116 = vmatpush1.bf16.msra.mxu0 0
    %117 = vmatprep.subr.bf16.mxu0 0
    %118 = vmatpush1.bf16.msra.mxu0 0
    %119 = vmatprep.subr.bf16.mxu0 0
    %120 = vmatpush1.bf16.msra.mxu0 0
    %121 = vmatprep.subr.bf16.mxu0 0
    %122 = vmatpush1.bf16.msra.mxu0 0
    %123 = vmatprep.subr.bf16.mxu0 0
    %124 = vmatpush1.bf16.msra.mxu0 0
    %125 = vmatprep.subr.bf16.mxu0 0
    %126 = vmatpush1.bf16.msra.mxu0 0
    %127 = vmatprep.subr.bf16.mxu0 0
    %128 = vmatpush1.bf16.msra.mxu0 0
    %129 = vmatprep.subr.bf16.mxu0 0
    %130 = vmatpush1.bf16.msra.mxu0 0
    %131 = vmatprep.subr.bf16.mxu0 0
    %132 = vmatpush1.bf16.msra.mxu0 0
    %133 = vmatprep.mubr.bf16.mxu0 0
    %134 = vmatmul.mubr.bf16.gmra.mrb[0].mxu0 %v99
    %v135 = vpop.f32.mrb[0].mxu0
    %v136 = vadd.f32 %v89, %v135
    %v137 = vpop.f32.mrb[0].mxu0
    %v138 = vpop.f32.mrb[0].mxu0
    %v139 = vpop.f32.mrb[0].mxu0
    %140 = vdwg.mxu0
    %v141 = vpack.c.bf16 %v136, %v136
    %v142 = vmax.bf16 %v141, 0
    %v143 = vld [vmem:[#allocation7] sm:$0xf]
    %v144 = vld [vmem:[#allocation7 + $0x4] sm:$0xf]
    %v145 = vld [vmem:[#allocation7 + $0x8] sm:$0xf]
    %v146 = vld [vmem:[#allocation7 + $0xc] sm:$0xf]
    %v147 = vld [vmem:[#allocation7 + $0x10] sm:$0xf]
    %v148 = vld [vmem:[#allocation7 + $0x14] sm:$0xf]
    %v149 = vld [vmem:[#allocation7 + $0x18] sm:$0xf]
    %v150 = vld [vmem:[#allocation7 + $0x1c] sm:$0xf]
    %v151 = vld [vmem:[#allocation7 + $0x20] sm:$0xf]
    %v152 = vld [vmem:[#allocation7 + $0x24] sm:$0xf]
    %v153 = vld [vmem:[#allocation7 + $0x28] sm:$0xf]
    %v154 = vld [vmem:[#allocation7 + $0x2c] sm:$0xf]
    %v155 = vld [vmem:[#allocation7 + $0x30] sm:$0xf]
    %v156 = vld [vmem:[#allocation7 + $0x34] sm:$0xf]
    %v157 = vld [vmem:[#allocation7 + $0x38] sm:$0xf]
    %v158 = vld [vmem:[#allocation7 + $0x3c] sm:$0xf]
    %v159 = vld [vmem:[%s5] sm:$0x1]
    %v161 = vlaneseq
    %v162 = vshrl.u32 %v161, 7
    %v163 = vsub.s32 0, %v162
    %v164 = vrot.slane %v159, %v163
    %v182 = vunpack.c.l.b16 %v143
    %v183 = vunpack.c.l.b16 %v144
    %v184 = vunpack.c.l.b16 %v145
    %v185 = vunpack.c.l.b16 %v146
    %v186 = vunpack.c.l.b16 %v147
    %v187 = vunpack.c.l.b16 %v148
    %v188 = vunpack.c.l.b16 %v149
    %v189 = vunpack.c.l.b16 %v150
    %v190 = vunpack.c.l.b16 %v151
    %v191 = vunpack.c.l.b16 %v152
    %v192 = vunpack.c.l.b16 %v153
    %v193 = vunpack.c.l.b16 %v154
    %v194 = vunpack.c.l.b16 %v155
    %v195 = vunpack.c.l.b16 %v156
    %v196 = vunpack.c.l.b16 %v157
    %v197 = vunpack.c.l.b16 %v158
    %v198 = vpack.c.b16 %v183, %v182
    %v199 = vpack.c.b16 %v185, %v184
    %v200 = vpack.c.b16 %v187, %v186
    %v201 = vpack.c.b16 %v189, %v188
    %v202 = vpack.c.b16 %v191, %v190
    %v203 = vpack.c.b16 %v193, %v192
    %v204 = vpack.c.b16 %v195, %v194
    %v205 = vpack.c.b16 %v197, %v196
    %214 = vmatprep.subr.bf16.mxu0 0
    %215 = vmatpush1.bf16.msra.mxu0 %v198
    %216 = vmatprep.subr.bf16.mxu0 0
    %217 = vmatpush1.bf16.msra.mxu0 %v199
    %218 = vmatprep.subr.bf16.mxu0 0
    %219 = vmatpush1.bf16.msra.mxu0 %v200
    %220 = vmatprep.subr.bf16.mxu0 0
    %221 = vmatpush1.bf16.msra.mxu0 %v201
    %222 = vmatprep.subr.bf16.mxu0 0
    %223 = vmatpush1.bf16.msra.mxu0 %v202
    %224 = vmatprep.subr.bf16.mxu0 0
    %225 = vmatpush1.bf16.msra.mxu0 %v203
    %226 = vmatprep.subr.bf16.mxu0 0
    %227 = vmatpush1.bf16.msra.mxu0 %v204
    %228 = vmatprep.subr.bf16.mxu0 0
    %229 = vmatpush1.bf16.msra.mxu0 %v205
    %230 = vmatprep.subr.bf16.mxu0 0
    %231 = vmatpush1.bf16.msra.mxu0 0
    %232 = vmatprep.subr.bf16.mxu0 0
    %233 = vmatpush1.bf16.msra.mxu0 0
    %234 = vmatprep.subr.bf16.mxu0 0
    %235 = vmatpush1.bf16.msra.mxu0 0
    %236 = vmatprep.subr.bf16.mxu0 0
    %237 = vmatpush1.bf16.msra.mxu0 0
    %238 = vmatprep.subr.bf16.mxu0 0
    %239 = vmatpush1.bf16.msra.mxu0 0
    %240 = vmatprep.subr.bf16.mxu0 0
    %241 = vmatpush1.bf16.msra.mxu0 0
    %242 = vmatprep.subr.bf16.mxu0 0
    %243 = vmatpush1.bf16.msra.mxu0 0
    %244 = vmatprep.subr.bf16.mxu0 0
    %245 = vmatpush1.bf16.msra.mxu0 0
    %246 = vmatprep.mubr.bf16.mxu0 0
    %247 = vmatmul.mubr.bf16.gmra.mrb[0].mxu0 %v142
    %v248 = vpop.f32.mrb[0].mxu0
    %v249 = vadd.f32 %v164, %v248
    %v250 = vpop.f32.mrb[0].mxu0
    %v251 = vpop.f32.mrb[0].mxu0
    %v252 = vpop.f32.mrb[0].mxu0
    %253 = vdwg.mxu0
    %v254 = vpack.c.bf16 %v249, %v249
    %v255 = vmax.bf16 %v254, 0
    %v256 = vld [vmem:[#allocation8] sm:$0xf]
    %v257 = vld [vmem:[#allocation8 + $0x4] sm:$0xf]
    %v258 = vld [vmem:[#allocation8 + $0x8] sm:$0xf]
    %v259 = vld [vmem:[#allocation8 + $0xc] sm:$0xf]
    %v260 = vld [vmem:[#allocation8 + $0x10] sm:$0xf]
    %v261 = vld [vmem:[#allocation8 + $0x14] sm:$0xf]
    %v262 = vld [vmem:[#allocation8 + $0x18] sm:$0xf]
    %v263 = vld [vmem:[#allocation8 + $0x1c] sm:$0xf]
    %v264 = vld [vmem:[#allocation8 + $0x20] sm:$0xf]
    %v265 = vld [vmem:[#allocation8 + $0x24] sm:$0xf]
    %v266 = vld [vmem:[#allocation8 + $0x28] sm:$0xf]
    %v267 = vld [vmem:[#allocation8 + $0x2c] sm:$0xf]
    %v268 = vld [vmem:[#allocation8 + $0x30] sm:$0xf]
    %v269 = vld [vmem:[#allocation8 + $0x34] sm:$0xf]
    %v270 = vld [vmem:[#allocation8 + $0x38] sm:$0xf]
    %v271 = vld [vmem:[#allocation8 + $0x3c] sm:$0xf]
    %v272 = vld [vmem:[%s6] sm:$0x1]
    %v274 = vlaneseq
    %v275 = vshrl.u32 %v274, 7
    %v276 = vsub.s32 0, %v275
    %v277 = vrot.slane %v272, %v276
    %v295 = vunpack.c.l.b16 %v256
    %v296 = vunpack.c.l.b16 %v257
    %v297 = vunpack.c.l.b16 %v258
    %v298 = vunpack.c.l.b16 %v259
    %v299 = vunpack.c.l.b16 %v260
    %v300 = vunpack.c.l.b16 %v261
    %v301 = vunpack.c.l.b16 %v262
    %v302 = vunpack.c.l.b16 %v263
    %v303 = vunpack.c.l.b16 %v264
    %v304 = vunpack.c.l.b16 %v265
    %v305 = vunpack.c.l.b16 %v266
    %v306 = vunpack.c.l.b16 %v267
    %v307 = vunpack.c.l.b16 %v268
    %v308 = vunpack.c.l.b16 %v269
    %v309 = vunpack.c.l.b16 %v270
    %v310 = vunpack.c.l.b16 %v271
    %v311 = vpack.c.b16 %v296, %v295
    %v312 = vpack.c.b16 %v298, %v297
    %v313 = vpack.c.b16 %v300, %v299
    %v314 = vpack.c.b16 %v302, %v301
    %v315 = vpack.c.b16 %v304, %v303
    %v316 = vpack.c.b16 %v306, %v305
    %v317 = vpack.c.b16 %v308, %v307
    %v318 = vpack.c.b16 %v310, %v309
    %327 = vmatprep.subr.bf16.mxu0 0
    %328 = vmatpush1.bf16.msra.mxu0 %v311
    %329 = vmatprep.subr.bf16.mxu0 0
    %330 = vmatpush1.bf16.msra.mxu0 %v312
    %331 = vmatprep.subr.bf16.mxu0 0
    %332 = vmatpush1.bf16.msra.mxu0 %v313
    %333 = vmatprep.subr.bf16.mxu0 0
    %334 = vmatpush1.bf16.msra.mxu0 %v314
    %335 = vmatprep.subr.bf16.mxu0 0
    %336 = vmatpush1.bf16.msra.mxu0 %v315
    %337 = vmatprep.subr.bf16.mxu0 0
    %338 = vmatpush1.bf16.msra.mxu0 %v316
    %339 = vmatprep.subr.bf16.mxu0 0
    %340 = vmatpush1.bf16.msra.mxu0 %v317
    %341 = vmatprep.subr.bf16.mxu0 0
    %342 = vmatpush1.bf16.msra.mxu0 %v318
    %343 = vmatprep.subr.bf16.mxu0 0
    %344 = vmatpush1.bf16.msra.mxu0 0
    %345 = vmatprep.subr.bf16.mxu0 0
    %346 = vmatpush1.bf16.msra.mxu0 0
    %347 = vmatprep.subr.bf16.mxu0 0
    %348 = vmatpush1.bf16.msra.mxu0 0
    %349 = vmatprep.subr.bf16.mxu0 0
    %350 = vmatpush1.bf16.msra.mxu0 0
    %351 = vmatprep.subr.bf16.mxu0 0
    %352 = vmatpush1.bf16.msra.mxu0 0
    %353 = vmatprep.subr.bf16.mxu0 0
    %354 = vmatpush1.bf16.msra.mxu0 0
    %355 = vmatprep.subr.bf16.mxu0 0
    %356 = vmatpush1.bf16.msra.mxu0 0
    %357 = vmatprep.subr.bf16.mxu0 0
    %358 = vmatpush1.bf16.msra.mxu0 0
    %359 = vmatprep.mubr.bf16.mxu0 0
    %360 = vmatmul.mubr.bf16.gmra.mrb[0].mxu0 %v255
    %v361 = vpop.f32.mrb[0].mxu0
    %v362 = vadd.f32 %v277, %v361
    %v363 = vpop.f32.mrb[0].mxu0
    %v364 = vpop.f32.mrb[0].mxu0
    %v365 = vpop.f32.mrb[0].mxu0
    %366 = vdwg.mxu0
    %367 = vst [vmem:[#allocation10] sm:$0xff] %v362
    // Predicated region
    $region46: #{tpu_custom_call.1} parent=1 // pred_check
      _
    $region47: #{tpu_custom_call.1} parent=1 // pred_check_branch
      %369 = sbr.rel (0) target = $region49
    $region48: #{tpu_custom_call.1} parent=1 // pred_region
      %s371 = ssub.s32 128, 128
      %372 = vsyncadd [#allocation4], %s371
      %s374 = sshll.u32 [#allocation10], 4
      %s375 = int_to_ptr.vmem [resolvable:$true] %s374
      %377 = dma.vmem_to_hbm [thread:$0]  %s375, 128, %s7, [#allocation4]
    $region49: #{tpu_custom_call.1} parent=1 // pred_fallthru
      _
    // Predicated region
    $region50: #{tpu_custom_call.1} parent=1 // pred_check
      _
    $region51: #{tpu_custom_call.1} parent=1 // pred_check_branch
      %379 = sbr.rel (0) target = $region53
    $region52: #{tpu_custom_call.1} parent=1 // pred_region
      %380 = dma.done [#allocation4], 128
    $region53: #{tpu_custom_call.1} parent=1 // pred_fallthru
      _
    %381 = vsyncpa [#allocation3], 1
    %382 = vsyncpa [#allocation6], 1
    %383 = vsyncpa [#allocation9], 1
    %384 = vsyncpa [#allocation4], 1

// kernel: tpu_custom_call.1
$region0: #{tpu_custom_call.1}
  #allocation0 [shape = 'u32[]', space=smem, size = 0x4, offset = 0x4, fixed_abs, tag = 'smem constant byte address 0x4 - core index']
  #allocation1 [shape = 'u32[144,128]{1,0:T(1,128)}', space=vmem, size = 0x12000, scoped, tag = 'internal scratch']
  %s0 = inlined_call_operand.hbm [shape: bf16[8,16], index: 0, kind: input, shape index: {}]
  %s1 = inlined_call_operand.hbm [shape: bf16[16,128], index: 1, kind: input, shape index: {}]
  %s2 = inlined_call_operand.hbm [shape: bf16[128,128], index: 2, kind: input, shape index: {}]
  %s3 = inlined_call_operand.hbm [shape: bf16[128,128], index: 3, kind: input, shape index: {}]
  %s4 = inlined_call_operand.vmem [shape: f32[1,128], index: 4, kind: input, shape index: {}]
  %s5 = inlined_call_operand.vmem [shape: f32[1,128], index: 5, kind: input, shape index: {}]
  %s6 = inlined_call_operand.vmem [shape: f32[1,128], index: 6, kind: input, shape index: {}]
  %s7 = inlined_call_operand.hbm [shape: f32[8,128], index: 7, kind: output, shape index: {}]
  %s8 = sld [smem:[#allocation0]]
  $region54: #{tpu_custom_call.1} parent=0
    _
  %s10 = ssub.s32 1, %s8
  %s11 = scalar_select 0, %s10, %s8
  $region1: #{tpu_custom_call.1} parent=0
    #allocation2 [shape = 'u8[2048]{0}', space=vmem, size = 0x800, scoped, tag = 'input window, operand 0, single buffered']
    #allocation3 [shape = 's32[1]{0}', space=sflag, size = 0x4, scoped, tag = 'scoped memory for tpu_custom_call.1']
    #allocation4 [shape = 's32[1]{0}', space=sflag, size = 0x4, scoped, tag = 'scoped memory for tpu_custom_call.1']
    #allocation5 [shape = 'u8[4096]{0}', space=vmem, size = 0x1000, scoped, tag = 'input window, operand 1, single buffered']
    #allocation6 [shape = 's32[1]{0}', space=sflag, size = 0x4, scoped, tag = 'scoped memory for tpu_custom_call.1']
    #allocation7 [shape = 'u8[32768]{0}', space=vmem, size = 0x8000, scoped, tag = 'input window, operand 2, single buffered']
    #allocation8 [shape = 'u8[32768]{0}', space=vmem, size = 0x8000, scoped, tag = 'input window, operand 3, single buffered']
    #allocation9 [shape = 's32[1]{0}', space=sflag, size = 0x4, scoped, tag = 'scoped memory for tpu_custom_call.1']
    #allocation10 [shape = 'u8[4096]{0}', space=vmem, size = 0x1000, scoped, tag = 'output window, operand 0, single buffered']
    %12 = vsyncpa [#allocation3], 0
    %13 = vsyncpa [#allocation6], 0
    %14 = vsyncpa [#allocation9], 0
    %15 = vsyncpa [#allocation4], 0
    // Predicated region
    $region2: #{tpu_custom_call.1} parent=1 // pred_check
      _
    $region3: #{tpu_custom_call.1} parent=1 // pred_check_branch
      %17 = sbr.rel (0) target = $region5
    $region4: #{tpu_custom_call.1} parent=1 // pred_region
      %s19 = ssub.s32 64, 64
      %20 = vsyncadd [#allocation3], %s19
      %s22 = sshll.u32 [#allocation2], 4
      %s23 = int_to_ptr.vmem [resolvable:$true] %s22
      %25 = dma.hbm_to_vmem [thread:$0]  %s0, 64, %s23, [#allocation3]
    $region5: #{tpu_custom_call.1} parent=1 // pred_fallthru
      _
    // Predicated region
    $region6: #{tpu_custom_call.1} parent=1 // pred_check
      _
    $region7: #{tpu_custom_call.1} parent=1 // pred_check_branch
      %27 = sbr.rel (0) target = $region9
    $region8: #{tpu_custom_call.1} parent=1 // pred_region
      %s29 = ssub.s32 128, 128
      %30 = vsyncadd [#allocation6], %s29
      %s31 = sshll.u32 [#allocation5], 4
      %s32 = int_to_ptr.vmem [resolvable:$true] %s31
      %37 = dma.hbm_to_vmem [thread:$0]  %s1, 128, %s32, [#allocation6], 64, 64, 4
    $region9: #{tpu_custom_call.1} parent=1 // pred_fallthru
      _
    // Predicated region
    $region10: #{tpu_custom_call.1} parent=1 // pred_check
      _
    $region11: #{tpu_custom_call.1} parent=1 // pred_check_branch
      %39 = sbr.rel (0) target = $region13
    $region12: #{tpu_custom_call.1} parent=1 // pred_region
      %s41 = ssub.s32 1024, 1024
      %42 = vsyncadd [#allocation6], %s41
      %s43 = sshll.u32 [#allocation7], 4
      %s44 = int_to_ptr.vmem [resolvable:$true] %s43
      %49 = dma.hbm_to_vmem [thread:$0]  %s2, 1024, %s44, [#allocation6], 64, 64, 4
    $region13: #{tpu_custom_call.1} parent=1 // pred_fallthru
      _
    // Predicated region
    $region14: #{tpu_custom_call.1} parent=1 // pred_check
      _
    $region15: #{tpu_custom_call.1} parent=1 // pred_check_branch
      %51 = sbr.rel (0) target = $region17
    $region16: #{tpu_custom_call.1} parent=1 // pred_region
      %s53 = ssub.s32 1024, 1024
      %54 = vsyncadd [#allocation9], %s53
      %s55 = sshll.u32 [#allocation8], 4
      %s56 = int_to_ptr.vmem [resolvable:$true] %s55
      %61 = dma.hbm_to_vmem [thread:$0]  %s3, 1024, %s56, [#allocation9], 64, 64, 4
    $region17: #{tpu_custom_call.1} parent=1 // pred_fallthru
      _
    // Predicated region
    $region18: #{tpu_custom_call.1} parent=1 // pred_check
      _
    $region19: #{tpu_custom_call.1} parent=1 // pred_check_branch
      %63 = sbr.rel (0) target = $region21
    $region20: #{tpu_custom_call.1} parent=1 // pred_region
      _
    $region21: #{tpu_custom_call.1} parent=1 // pred_fallthru
      _
    // Predicated region
    $region22: #{tpu_custom_call.1} parent=1 // pred_check
      _
    $region23: #{tpu_custom_call.1} parent=1 // pred_check_branch
      %65 = sbr.rel (0) target = $region25
    $region24: #{tpu_custom_call.1} parent=1 // pred_region
      _
    $region25: #{tpu_custom_call.1} parent=1 // pred_fallthru
      _
    // Predicated region
    $region26: #{tpu_custom_call.1} parent=1 // pred_check
      _
    $region27: #{tpu_custom_call.1} parent=1 // pred_check_branch
      %67 = sbr.rel (0) target = $region29
    $region28: #{tpu_custom_call.1} parent=1 // pred_region
      _
    $region29: #{tpu_custom_call.1} parent=1 // pred_fallthru
      _
    // Predicated region
    $region30: #{tpu_custom_call.1} parent=1 // pred_check
      _
    $region31: #{tpu_custom_call.1} parent=1 // pred_check_branch
      %69 = sbr.rel (0) target = $region33
    $region32: #{tpu_custom_call.1} parent=1 // pred_region
      %70 = dma.done [#allocation3], 64
    $region33: #{tpu_custom_call.1} parent=1 // pred_fallthru
      _
    // Predicated region
    $region34: #{tpu_custom_call.1} parent=1 // pred_check
      _
    $region35: #{tpu_custom_call.1} parent=1 // pred_check_branch
      %72 = sbr.rel (0) target = $region37
    $region36: #{tpu_custom_call.1} parent=1 // pred_region
      %73 = dma.done [#allocation6], 128
    $region37: #{tpu_custom_call.1} parent=1 // pred_fallthru
      _
    // Predicated region
    $region38: #{tpu_custom_call.1} parent=1 // pred_check
      _
    $region39: #{tpu_custom_call.1} parent=1 // pred_check_branch
      %75 = sbr.rel (0) target = $region41
    $region40: #{tpu_custom_call.1} parent=1 // pred_region
      %76 = dma.done [#allocation6], 1024
    $region41: #{tpu_custom_call.1} parent=1 // pred_fallthru
      _
    // Predicated region
    $region42: #{tpu_custom_call.1} parent=1 // pred_check
      _
    $region43: #{tpu_custom_call.1} parent=1 // pred_check_branch
      %78 = sbr.rel (0) target = $region45
    $region44: #{tpu_custom_call.1} parent=1 // pred_region
      %79 = dma.done [#allocation9], 1024
    $region45: #{tpu_custom_call.1} parent=1 // pred_fallthru
      _
    %v81 = vld [vmem:[#allocation2] sm:$0xf]
    %v82 = vld [vmem:[#allocation5] sm:$0xf]
    %v83 = vld [vmem:[#allocation5 + $0x4] sm:$0xf]
    %v84 = vld [vmem:[%s4] sm:$0x1]
    %v86 = vlaneseq
    %v87 = vshrl.u32 %v86, 7
    %v88 = vsub.s32 0, %v87
    %v89 = vrot.slane %v84, %v88
    %v93 = vunpack.c.l.b16 %v82
    %v94 = vunpack.c.l.b16 %v83
    %v95 = vpack.c.b16 %v94, %v93
    %vm97 = vcmask 130048
    %v99 = vsel %vm97, %v81, 0
    %101 = vmatprep.subr.bf16.mxu0 0
    %102 = vmatpush1.bf16.msra.mxu0 %v95
    %103 = vmatprep.subr.bf16.mxu0 0
    %104 = vmatpush1.bf16.msra.mxu0 0
    %105 = vmatprep.subr.bf16.mxu0 0
    %106 = vmatpush1.bf16.msra.mxu0 0
    %107 = vmatprep.subr.bf16.mxu0 0
    %108 = vmatpush1.bf16.msra.mxu0 0
    %109 = vmatprep.subr.bf16.mxu0 0
    %110 = vmatpush1.bf16.msra.mxu0 0
    %111 = vmatprep.subr.bf16.mxu0 0
    %112 = vmatpush1.bf16.msra.mxu0 0
    %113 = vmatprep.subr.bf16.mxu0 0
    %114 = vmatpush1.bf16.msra.mxu0 0
    %115 = vmatprep.subr.bf16.mxu0 0
    %116 = vmatpush1.bf16.msra.mxu0 0
    %117 = vmatprep.subr.bf16.mxu0 0
    %118 = vmatpush1.bf16.msra.mxu0 0
    %119 = vmatprep.subr.bf16.mxu0 0
    %120 = vmatpush1.bf16.msra.mxu0 0
    %121 = vmatprep.subr.bf16.mxu0 0
    %122 = vmatpush1.bf16.msra.mxu0 0
    %123 = vmatprep.subr.bf16.mxu0 0
    %124 = vmatpush1.bf16.msra.mxu0 0
    %125 = vmatprep.subr.bf16.mxu0 0
    %126 = vmatpush1.bf16.msra.mxu0 0
    %127 = vmatprep.subr.bf16.mxu0 0
    %128 = vmatpush1.bf16.msra.mxu0 0
    %129 = vmatprep.subr.bf16.mxu0 0
    %130 = vmatpush1.bf16.msra.mxu0 0
    %131 = vmatprep.subr.bf16.mxu0 0
    %132 = vmatpush1.bf16.msra.mxu0 0
    %133 = vmatprep.mubr.bf16.mxu0 0
    %134 = vmatmul.mubr.bf16.gmra.mrb[0].mxu0 %v99
    %v135 = vpop.f32.mrb[0].mxu0
    %v136 = vadd.f32 %v89, %v135
    %v137 = vpop.f32.mrb[0].mxu0
    %v138 = vpop.f32.mrb[0].mxu0
    %v139 = vpop.f32.mrb[0].mxu0
    %140 = vdwg.mxu0
    %v141 = vpack.c.bf16 %v136, %v136
    %v142 = vmax.bf16 %v141, 0
    %v143 = vld [vmem:[#allocation7] sm:$0xf]
    %v144 = vld [vmem:[#allocation7 + $0x4] sm:$0xf]
    %v145 = vld [vmem:[#allocation7 + $0x8] sm:$0xf]
    %v146 = vld [vmem:[#allocation7 + $0xc] sm:$0xf]
    %v147 = vld [vmem:[#allocation7 + $0x10] sm:$0xf]
    %v148 = vld [vmem:[#allocation7 + $0x14] sm:$0xf]
    %v149 = vld [vmem:[#allocation7 + $0x18] sm:$0xf]
    %v150 = vld [vmem:[#allocation7 + $0x1c] sm:$0xf]
    %v151 = vld [vmem:[#allocation7 + $0x20] sm:$0xf]
    %v152 = vld [vmem:[#allocation7 + $0x24] sm:$0xf]
    %v153 = vld [vmem:[#allocation7 + $0x28] sm:$0xf]
    %v154 = vld [vmem:[#allocation7 + $0x2c] sm:$0xf]
    %v155 = vld [vmem:[#allocation7 + $0x30] sm:$0xf]
    %v156 = vld [vmem:[#allocation7 + $0x34] sm:$0xf]
    %v157 = vld [vmem:[#allocation7 + $0x38] sm:$0xf]
    %v158 = vld [vmem:[#allocation7 + $0x3c] sm:$0xf]
    %v159 = vld [vmem:[%s5] sm:$0x1]
    %v161 = vlaneseq
    %v162 = vshrl.u32 %v161, 7
    %v163 = vsub.s32 0, %v162
    %v164 = vrot.slane %v159, %v163
    %v182 = vunpack.c.l.b16 %v143
    %v183 = vunpack.c.l.b16 %v144
    %v184 = vunpack.c.l.b16 %v145
    %v185 = vunpack.c.l.b16 %v146
    %v186 = vunpack.c.l.b16 %v147
    %v187 = vunpack.c.l.b16 %v148
    %v188 = vunpack.c.l.b16 %v149
    %v189 = vunpack.c.l.b16 %v150
    %v190 = vunpack.c.l.b16 %v151
    %v191 = vunpack.c.l.b16 %v152
    %v192 = vunpack.c.l.b16 %v153
    %v193 = vunpack.c.l.b16 %v154
    %v194 = vunpack.c.l.b16 %v155
    %v195 = vunpack.c.l.b16 %v156
    %v196 = vunpack.c.l.b16 %v157
    %v197 = vunpack.c.l.b16 %v158
    %v198 = vpack.c.b16 %v183, %v182
    %v199 = vpack.c.b16 %v185, %v184
    %v200 = vpack.c.b16 %v187, %v186
    %v201 = vpack.c.b16 %v189, %v188
    %v202 = vpack.c.b16 %v191, %v190
    %v203 = vpack.c.b16 %v193, %v192
    %v204 = vpack.c.b16 %v195, %v194
    %v205 = vpack.c.b16 %v197, %v196
    %214 = vmatprep.subr.bf16.mxu0 0
    %215 = vmatpush1.bf16.msra.mxu0 %v198
    %216 = vmatprep.subr.bf16.mxu0 0
    %217 = vmatpush1.bf16.msra.mxu0 %v199
    %218 = vmatprep.subr.bf16.mxu0 0
    %219 = vmatpush1.bf16.msra.mxu0 %v200
    %220 = vmatprep.subr.bf16.mxu0 0
    %221 = vmatpush1.bf16.msra.mxu0 %v201
    %222 = vmatprep.subr.bf16.mxu0 0
    %223 = vmatpush1.bf16.msra.mxu0 %v202
    %224 = vmatprep.subr.bf16.mxu0 0
    %225 = vmatpush1.bf16.msra.mxu0 %v203
    %226 = vmatprep.subr.bf16.mxu0 0
    %227 = vmatpush1.bf16.msra.mxu0 %v204
    %228 = vmatprep.subr.bf16.mxu0 0
    %229 = vmatpush1.bf16.msra.mxu0 %v205
    %230 = vmatprep.subr.bf16.mxu0 0
    %231 = vmatpush1.bf16.msra.mxu0 0
    %232 = vmatprep.subr.bf16.mxu0 0
    %233 = vmatpush1.bf16.msra.mxu0 0
    %234 = vmatprep.subr.bf16.mxu0 0
    %235 = vmatpush1.bf16.msra.mxu0 0
    %236 = vmatprep.subr.bf16.mxu0 0
    %237 = vmatpush1.bf16.msra.mxu0 0
    %238 = vmatprep.subr.bf16.mxu0 0
    %239 = vmatpush1.bf16.msra.mxu0 0
    %240 = vmatprep.subr.bf16.mxu0 0
    %241 = vmatpush1.bf16.msra.mxu0 0
    %242 = vmatprep.subr.bf16.mxu0 0
    %243 = vmatpush1.bf16.msra.mxu0 0
    %244 = vmatprep.subr.bf16.mxu0 0
    %245 = vmatpush1.bf16.msra.mxu0 0
    %246 = vmatprep.mubr.bf16.mxu0 0
    %247 = vmatmul.mubr.bf16.gmra.mrb[0].mxu0 %v142
    %v248 = vpop.f32.mrb[0].mxu0
    %v249 = vadd.f32 %v164, %v248
    %v250 = vpop.f32.mrb[0].mxu0
    %v251 = vpop.f32.mrb[0].mxu0
    %v252 = vpop.f32.mrb[0].mxu0
    %253 = vdwg.mxu0
    %v254 = vpack.c.bf16 %v249, %v249
    %v255 = vmax.bf16 %v254, 0
    %v256 = vld [vmem:[#allocation8] sm:$0xf]
    %v257 = vld [vmem:[#allocation8 + $0x4] sm:$0xf]
    %v258 = vld [vmem:[#allocation8 + $0x8] sm:$0xf]
    %v259 = vld [vmem:[#allocation8 + $0xc] sm:$0xf]
    %v260 = vld [vmem:[#allocation8 + $0x10] sm:$0xf]
    %v261 = vld [vmem:[#allocation8 + $0x14] sm:$0xf]
    %v262 = vld [vmem:[#allocation8 + $0x18] sm:$0xf]
    %v263 = vld [vmem:[#allocation8 + $0x1c] sm:$0xf]
    %v264 = vld [vmem:[#allocation8 + $0x20] sm:$0xf]
    %v265 = vld [vmem:[#allocation8 + $0x24] sm:$0xf]
    %v266 = vld [vmem:[#allocation8 + $0x28] sm:$0xf]
    %v267 = vld [vmem:[#allocation8 + $0x2c] sm:$0xf]
    %v268 = vld [vmem:[#allocation8 + $0x30] sm:$0xf]
    %v269 = vld [vmem:[#allocation8 + $0x34] sm:$0xf]
    %v270 = vld [vmem:[#allocation8 + $0x38] sm:$0xf]
    %v271 = vld [vmem:[#allocation8 + $0x3c] sm:$0xf]
    %v272 = vld [vmem:[%s6] sm:$0x1]
    %v274 = vlaneseq
    %v275 = vshrl.u32 %v274, 7
    %v276 = vsub.s32 0, %v275
    %v277 = vrot.slane %v272, %v276
    %v295 = vunpack.c.l.b16 %v256
    %v296 = vunpack.c.l.b16 %v257
    %v297 = vunpack.c.l.b16 %v258
    %v298 = vunpack.c.l.b16 %v259
    %v299 = vunpack.c.l.b16 %v260
    %v300 = vunpack.c.l.b16 %v261
    %v301 = vunpack.c.l.b16 %v262
    %v302 = vunpack.c.l.b16 %v263
    %v303 = vunpack.c.l.b16 %v264
    %v304 = vunpack.c.l.b16 %v265
    %v305 = vunpack.c.l.b16 %v266
    %v306 = vunpack.c.l.b16 %v267
    %v307 = vunpack.c.l.b16 %v268
    %v308 = vunpack.c.l.b16 %v269
    %v309 = vunpack.c.l.b16 %v270
    %v310 = vunpack.c.l.b16 %v271
    %v311 = vpack.c.b16 %v296, %v295
    %v312 = vpack.c.b16 %v298, %v297
    %v313 = vpack.c.b16 %v300, %v299
    %v314 = vpack.c.b16 %v302, %v301
    %v315 = vpack.c.b16 %v304, %v303
    %v316 = vpack.c.b16 %v306, %v305
    %v317 = vpack.c.b16 %v308, %v307
    %v318 = vpack.c.b16 %v310, %v309
    %327 = vmatprep.subr.bf16.mxu0 0
    %328 = vmatpush1.bf16.msra.mxu0 %v311
    %329 = vmatprep.subr.bf16.mxu0 0
    %330 = vmatpush1.bf16.msra.mxu0 %v312
    %331 = vmatprep.subr.bf16.mxu0 0
    %332 = vmatpush1.bf16.msra.mxu0 %v313
    %333 = vmatprep.subr.bf16.mxu0 0
    %334 = vmatpush1.bf16.msra.mxu0 %v314
    %335 = vmatprep.subr.bf16.mxu0 0
    %336 = vmatpush1.bf16.msra.mxu0 %v315
    %337 = vmatprep.subr.bf16.mxu0 0
    %338 = vmatpush1.bf16.msra.mxu0 %v316
    %339 = vmatprep.subr.bf16.mxu0 0
    %340 = vmatpush1.bf16.msra.mxu0 %v317
    %341 = vmatprep.subr.bf16.mxu0 0
    %342 = vmatpush1.bf16.msra.mxu0 %v318
    %343 = vmatprep.subr.bf16.mxu0 0
    %344 = vmatpush1.bf16.msra.mxu0 0
    %345 = vmatprep.subr.bf16.mxu0 0
    %346 = vmatpush1.bf16.msra.mxu0 0
    %347 = vmatprep.subr.bf16.mxu0 0
    %348 = vmatpush1.bf16.msra.mxu0 0
    %349 = vmatprep.subr.bf16.mxu0 0
    %350 = vmatpush1.bf16.msra.mxu0 0
    %351 = vmatprep.subr.bf16.mxu0 0
    %352 = vmatpush1.bf16.msra.mxu0 0
    %353 = vmatprep.subr.bf16.mxu0 0
    %354 = vmatpush1.bf16.msra.mxu0 0
    %355 = vmatprep.subr.bf16.mxu0 0
    %356 = vmatpush1.bf16.msra.mxu0 0
    %357 = vmatprep.subr.bf16.mxu0 0
    %358 = vmatpush1.bf16.msra.mxu0 0
    %359 = vmatprep.mubr.bf16.mxu0 0
    %360 = vmatmul.mubr.bf16.gmra.mrb[0].mxu0 %v255
    %v361 = vpop.f32.mrb[0].mxu0
    %v362 = vadd.f32 %v277, %v361
    %v363 = vpop.f32.mrb[0].mxu0
    %v364 = vpop.f32.mrb[0].mxu0
    %v365 = vpop.f32.mrb[0].mxu0
    %366 = vdwg.mxu0
    %367 = vst [vmem:[#allocation10] sm:$0xff] %v362
    // Predicated region
    $region46: #{tpu_custom_call.1} parent=1 // pred_check
      _
    $region47: #{tpu_custom_call.1} parent=1 // pred_check_branch
      %369 = sbr.rel (0) target = $region49
    $region48: #{tpu_custom_call.1} parent=1 // pred_region
      %s371 = ssub.s32 128, 128
      %372 = vsyncadd [#allocation4], %s371
      %s374 = sshll.u32 [#allocation10], 4
      %s375 = int_to_ptr.vmem [resolvable:$true] %s374
      %377 = dma.vmem_to_hbm [thread:$0]  %s375, 128, %s7, [#allocation4]
    $region49: #{tpu_custom_call.1} parent=1 // pred_fallthru
      _
    // Predicated region
    $region50: #{tpu_custom_call.1} parent=1 // pred_check
      _
    $region51: #{tpu_custom_call.1} parent=1 // pred_check_branch
      %379 = sbr.rel (0) target = $region53
    $region52: #{tpu_custom_call.1} parent=1 // pred_region
      %380 = dma.done [#allocation4], 128
    $region53: #{tpu_custom_call.1} parent=1 // pred_fallthru
      _
    %381 = vsyncpa [#allocation3], 1
    %382 = vsyncpa [#allocation6], 1
    %383 = vsyncpa [#allocation9], 1
    %384 = vsyncpa [#allocation4], 1

</llo_original>
